<compile_context>
chip_gen: v7x
topology: tpu7x:2x2x1
jax: 0.10.0
libtpu: 0.0.40
codegen_flags: <defaults>
</compile_context>

<pallas_src>
import math
from functools import partial

import jax
import jax.numpy as jnp
from jax.experimental import pallas as pl
from jax.experimental.pallas import tpu as pltpu


def _round_up(x, m):
    return (x + m - 1) // m * m


def _gc_agg_kernel(adj_d_ref, adj_a_ref, sup_ref, b_ref, out_ref):
    """One grid step = one row tile of one protein.

    out[:, :fp] = adj_d_tile @ sup[:, :fp] + b[:, :fp]
    out[:, fp:] = adj_a_tile @ sup[:, fp:] + b[:, fp:]

    fp (per-head padded width) is a multiple of 128, so the ref slices feeding
    the MXU and the two half-stores are all 128-lane aligned (unmasked).
    """
    fp = out_ref.shape[-1] // 2
    out_ref[:, :fp] = (
        jnp.dot(adj_d_ref[...], sup_ref[:, :fp],
                preferred_element_type=jnp.float32)
        + b_ref[:, :fp]
    ).astype(out_ref.dtype)
    out_ref[:, fp:] = (
        jnp.dot(adj_a_ref[...], sup_ref[:, fp:],
                preferred_element_type=jnp.float32)
        + b_ref[:, fp:]
    ).astype(out_ref.dtype)


def _vmem_budget_and_limit():
    """Chip-aware VMEM planning: ~70% of physical VMEM for tiling, ~78% as the
    explicit Mosaic scoped-VMEM limit.  Falls back to a v7x-safe 64 MiB."""
    try:
        cap = int(pltpu.get_tpu_info().vmem_capacity_bytes)
    except Exception:
        cap = None
    if not cap or cap <= 0:
        cap = 64 * 1024 * 1024
    return int(cap * 0.70), int(cap * 0.78)


def _pick_tm(n, fp2, budget):
    """Largest row tile whose honestly-counted footprint fits `budget`:
    2 adjacency tiles (tm x n) + output tile (tm x fp2), each double-buffered,
    plus the resident sup (n x fp2) and bias, counted with 2 buffers."""
    f32 = 4
    resident = 2 * (n * fp2 * f32) + 2 * (8 * fp2 * f32)   # sup + bias

    def tile_bytes(tm):
        return 2 * (2 * tm * n * f32) + 2 * (tm * fp2 * f32)

    if n <= 1024 and resident + tile_bytes(n) <= budget:
        return n                                   # single full tile
    for tm in (1024, 512, 256, 128):
        if tm < n and resident + tile_bytes(tm) <= budget:
            return tm
    # TODO(synk): switch to K-tiling once even a 128-row tile does not fit.
    return min(n, 128)


def _gc_aggregate(adj_d, adj_a, sup, b_cat):
    """out = [adj_d @ sup[:, :fp] | adj_a @ sup[:, fp:]] + b_cat, shape (N, fp2)."""
    n = adj_d.shape[0]
    fp2 = sup.shape[1]
    budget, limit = _vmem_budget_and_limit()
    tm = _pick_tm(n, fp2, budget)

    return pl.pallas_call(
        _gc_agg_kernel,
        out_shape=jax.ShapeDtypeStruct((n, fp2), jnp.float32),
        grid=(pl.cdiv(n, tm),),
        in_specs=[
            # Row tiles of the two adjacency matrices (pipelined DMA straight
            # from the caller's f32 arrays; last tile may be partial).
            pl.BlockSpec((tm, n), lambda i: (i, 0)),
            pl.BlockSpec((tm, n), lambda i: (i, 0)),
            # Precomputed support matrix and bias: constant index -> resident
            # in VMEM across the whole grid.
            pl.BlockSpec((n, fp2), lambda i: (0, 0)),
            pl.BlockSpec((1, fp2), lambda i: (0, 0)),
        ],
        out_specs=pl.BlockSpec((tm, fp2), lambda i: (i, 0)),
        compiler_params=pltpu.CompilerParams(
            dimension_semantics=("parallel",),   # row tiles are independent
            vmem_limit_bytes=limit,
        ),
        cost_estimate=pl.CostEstimate(
            flops=int(2 * n * n * fp2),
            transcendentals=0,
            bytes_accessed=int(2 * n * n * 4 + 2 * n * fp2 * 4 + fp2 * 4),
        ),
    )(adj_d, adj_a, sup, b_cat)


@partial(jax.jit, static_argnames=("fout",))
def gc4_protein_forward(l_vertex, l_adj_distance, l_adj_angle,
                        r_vertex, r_adj_distance, r_adj_angle,
                        w_cat, b_cat, fout):
    """Forward for both proteins; returns the four (N, fout) f32 outputs."""
    fp = w_cat.shape[1] // 2
    # Cheap support matmul stays in XLA at full f32 precision; the padded head
    # columns of w_cat are exact zeros, so sup comes out already lane-padded
    # with zeros -- no separate padding pass over any O(N^2) data.
    l_sup = jnp.dot(l_vertex, w_cat, precision=jax.lax.Precision.HIGHEST)
    r_sup = jnp.dot(r_vertex, w_cat, precision=jax.lax.Precision.HIGHEST)

    l_out = _gc_aggregate(l_adj_distance, l_adj_angle, l_sup, b_cat)
    r_out = _gc_aggregate(r_adj_distance, r_adj_angle, r_sup, b_cat)

    return (l_out[:, :fout], l_out[:, fp:fp + fout],
            r_out[:, :fout], r_out[:, fp:fp + fout])


class GC4ProteinPallas:
    """JAX/Pallas port of the PyTorch GC4Protein module."""

    def __init__(self, in_features, out_features, key):
        self.in_features = in_features
        self.out_features = out_features
        stdv = 1.0 / math.sqrt(out_features)
        k_d, k_a = jax.random.split(key)
        # Matches reset_parameters(): U(-stdv, stdv) weights, zero bias.
        self.weights_distance = jax.random.uniform(
            k_d, (in_features, out_features), jnp.float32, -stdv, stdv)
        self.weights_angle = jax.random.uniform(
            k_a, (in_features, out_features), jnp.float32, -stdv, stdv)
        self.bias_distance = jnp.zeros((out_features,), jnp.float32)
        self.bias_angle = jnp.zeros((out_features,), jnp.float32)

        # Pack [W_d | W_a] once, each head padded to a multiple of 128 lanes so
        # sup / bias / output are lane-dense and the halves split 128-aligned.
        fp = _round_up(out_features, 128)
        w_cat = jnp.zeros((in_features, 2 * fp), jnp.float32)
        w_cat = w_cat.at[:, :out_features].set(self.weights_distance)
        w_cat = w_cat.at[:, fp:fp + out_features].set(self.weights_angle)
        b_cat = jnp.zeros((1, 2 * fp), jnp.float32)
        b_cat = b_cat.at[0, :out_features].set(self.bias_distance)
        b_cat = b_cat.at[0, fp:fp + out_features].set(self.bias_angle)
        self._w_cat = w_cat
        self._b_cat = b_cat

    def __call__(self, l_vertex, l_adj_distance, l_adj_angle,
                 r_vertex, r_adj_distance, r_adj_angle):
        return gc4_protein_forward(
            l_vertex, l_adj_distance, l_adj_angle,
            r_vertex, r_adj_distance, r_adj_angle,
            self._w_cat, self._b_cat, fout=self.out_features)


if __name__ == "__main__":
    key = jax.random.PRNGKey(0)
    k_mod, k_lv, k_lad, k_laa, k_rv, k_rad, k_raa = jax.random.split(key, 7)

    in_features, out_features = 32, 32
    N_l, N_r = 16, 24  # two proteins with different node counts

    module = GC4ProteinPallas(in_features, out_features, k_mod)

    l_vertex = jax.random.normal(k_lv, (N_l, in_features), jnp.float32)
    l_adj_distance = jax.random.normal(k_lad, (N_l, N_l), jnp.float32)
    l_adj_angle = jax.random.normal(k_laa, (N_l, N_l), jnp.float32)
    r_vertex = jax.random.normal(k_rv, (N_r, in_features), jnp.float32)
    r_adj_distance = jax.random.normal(k_rad, (N_r, N_r), jnp.float32)
    r_adj_angle = jax.random.normal(k_raa, (N_r, N_r), jnp.float32)

    outs = module(l_vertex, l_adj_distance, l_adj_angle,
                  r_vertex, r_adj_distance, r_adj_angle)
    outs = jax.block_until_ready(outs)

    # Full-f32 reference matching the PyTorch module.
    hp = jax.lax.Precision.HIGHEST

    def ref_side(v, ad, aa):
        sd = jnp.dot(v, module.weights_distance, precision=hp)
        sa = jnp.dot(v, module.weights_angle, precision=hp)
        od = jnp.dot(ad, sd, precision=hp) + module.bias_distance
        oa = jnp.dot(aa, sa, precision=hp) + module.bias_angle
        return od, oa

    ref = (*ref_side(l_vertex, l_adj_distance, l_adj_angle),
           *ref_side(r_vertex, r_adj_distance, r_adj_angle))
    for got, want in zip(outs, ref):
        assert got.shape == want.shape, (got.shape, want.shape)
        assert got.dtype == want.dtype, (got.dtype, want.dtype)
        err = float(jnp.max(jnp.abs(got - want)))
        assert jnp.allclose(got, want, atol=2e-2, rtol=2e-2), err

    print("KERNEL_OK")
</pallas_src>

<mosaic_0001>
module attributes {stable_mosaic.version = 11 : i64} {
  func.func @_gc_agg_kernel(%arg0: i32, %arg1: memref<24x24xf32, #tpu.memory_space<vmem>>, %arg2: memref<24x24xf32, #tpu.memory_space<vmem>>, %arg3: memref<24x256xf32, #tpu.memory_space<vmem>>, %arg4: memref<1x256xf32, #tpu.memory_space<vmem>>, %arg5: memref<24x256xf32, #tpu.memory_space<vmem>>) attributes {dimension_semantics = [#tpu.dimension_semantics<parallel>], iteration_bounds = array<i64: 1>, scalar_prefetch = 0 : i64, scratch_operands = 0 : i64, tpu.core_type = #tpu.core_type<tc>, window_params = [{transform_indices = @transform_0, window_bounds = array<i64: 24, 24>}, {transform_indices = @transform_1, window_bounds = array<i64: 24, 24>}, {pipeline_mode = #tpu.pipeline_mode<synchronous>, transform_indices = @transform_2, window_bounds = array<i64: 24, 256>}, {pipeline_mode = #tpu.pipeline_mode<synchronous>, transform_indices = @transform_3, window_bounds = array<i64: 1, 256>}, {transform_indices = @transform_4, window_bounds = array<i64: 24, 256>}]} {
    %c0 = arith.constant 0 : index
    %c0_0 = arith.constant 0 : index
    %0 = vector.load %arg1[%c0, %c0_0] : memref<24x24xf32, #tpu.memory_space<vmem>>, vector<24x24xf32>
    %c0_1 = arith.constant 0 : index
    %c0_2 = arith.constant 0 : index
    %1 = vector.load %arg3[%c0_1, %c0_2] : memref<24x256xf32, #tpu.memory_space<vmem>>, vector<24x128xf32>
    %cst = arith.constant dense<0.000000e+00> : vector<24x128xf32>
    %2 = tpu.matmul %0, %1, %cst {dimension_numbers = #tpu.dot_dimension_numbers<[1], [0], [0], [1], [0, 0, 1, 1], [], []>} : vector<24x24xf32>, vector<24x128xf32>, vector<24x128xf32> -> vector<24x128xf32>
    %c0_3 = arith.constant 0 : index
    %c0_4 = arith.constant 0 : index
    %3 = vector.load %arg4[%c0_3, %c0_4] : memref<1x256xf32, #tpu.memory_space<vmem>>, vector<1x128xf32>
    %4 = vector.broadcast %3 : vector<1x128xf32> to vector<24x128xf32>
    %5 = arith.addf %2, %4 : vector<24x128xf32>
    %c0_5 = arith.constant 0 : index
    %c0_6 = arith.constant 0 : index
    %6 = vector.load %arg5[%c0_5, %c0_6] : memref<24x256xf32, #tpu.memory_space<vmem>>, vector<24x128xf32>
    tpu.vector_store %arg5[%c0_5, %c0_6], %5 {strides = array<i32>} : memref<24x256xf32, #tpu.memory_space<vmem>>, vector<24x128xf32>,
    %c0_7 = arith.constant 0 : index
    %c0_8 = arith.constant 0 : index
    %7 = vector.load %arg2[%c0_7, %c0_8] : memref<24x24xf32, #tpu.memory_space<vmem>>, vector<24x24xf32>
    %c0_9 = arith.constant 0 : index
    %c128 = arith.constant 128 : index
    %8 = vector.load %arg3[%c0_9, %c128] : memref<24x256xf32, #tpu.memory_space<vmem>>, vector<24x128xf32>
    %cst_10 = arith.constant dense<0.000000e+00> : vector<24x128xf32>
    %9 = tpu.matmul %7, %8, %cst_10 {dimension_numbers = #tpu.dot_dimension_numbers<[1], [0], [0], [1], [0, 0, 1, 1], [], []>} : vector<24x24xf32>, vector<24x128xf32>, vector<24x128xf32> -> vector<24x128xf32>
    %c0_11 = arith.constant 0 : index
    %c128_12 = arith.constant 128 : index
    %10 = vector.load %arg4[%c0_11, %c128_12] : memref<1x256xf32, #tpu.memory_space<vmem>>, vector<1x128xf32>
    %11 = vector.broadcast %10 : vector<1x128xf32> to vector<24x128xf32>
    %12 = arith.addf %9, %11 : vector<24x128xf32>
    %c0_13 = arith.constant 0 : index
    %c128_14 = arith.constant 128 : index
    %13 = vector.load %arg5[%c0_13, %c128_14] : memref<24x256xf32, #tpu.memory_space<vmem>>, vector<24x128xf32>
    tpu.vector_store %arg5[%c0_13, %c128_14], %12 {strides = array<i32>} : memref<24x256xf32, #tpu.memory_space<vmem>>, vector<24x128xf32>,
    return
  }
  func.func @transform_0(%arg0: i32) -> (i32, i32) {
    %c0_i32 = arith.constant 0 : i32
    %c0_i32_0 = arith.constant 0 : i32
    return %arg0, %c0_i32 : i32, i32
  }
  func.func @transform_1(%arg0: i32) -> (i32, i32) {
    %c0_i32 = arith.constant 0 : i32
    %c0_i32_0 = arith.constant 0 : i32
    return %arg0, %c0_i32 : i32, i32
  }
  func.func @transform_2(%arg0: i32) -> (i32, i32) {
    %c0_i32 = arith.constant 0 : i32
    %c0_i32_0 = arith.constant 0 : i32
    %c0_i32_1 = arith.constant 0 : i32
    return %c0_i32, %c0_i32_0 : i32, i32
  }
  func.func @transform_3(%arg0: i32) -> (i32, i32) {
    %c0_i32 = arith.constant 0 : i32
    %c0_i32_0 = arith.constant 0 : i32
    %c0_i32_1 = arith.constant 0 : i32
    return %c0_i32, %c0_i32_0 : i32, i32
  }
  func.func @transform_4(%arg0: i32) -> (i32, i32) {
    %c0_i32 = arith.constant 0 : i32
    %c0_i32_0 = arith.constant 0 : i32
    return %arg0, %c0_i32 : i32, i32
  }
}

module attributes {stable_mosaic.version = 11 : i64} {
  func.func @_gc_agg_kernel(%arg0: i32, %arg1: memref<16x16xf32, #tpu.memory_space<vmem>>, %arg2: memref<16x16xf32, #tpu.memory_space<vmem>>, %arg3: memref<16x256xf32, #tpu.memory_space<vmem>>, %arg4: memref<1x256xf32, #tpu.memory_space<vmem>>, %arg5: memref<16x256xf32, #tpu.memory_space<vmem>>) attributes {dimension_semantics = [#tpu.dimension_semantics<parallel>], iteration_bounds = array<i64: 1>, scalar_prefetch = 0 : i64, scratch_operands = 0 : i64, tpu.core_type = #tpu.core_type<tc>, window_params = [{transform_indices = @transform_0, window_bounds = array<i64: 16, 16>}, {transform_indices = @transform_1, window_bounds = array<i64: 16, 16>}, {pipeline_mode = #tpu.pipeline_mode<synchronous>, transform_indices = @transform_2, window_bounds = array<i64: 16, 256>}, {pipeline_mode = #tpu.pipeline_mode<synchronous>, transform_indices = @transform_3, window_bounds = array<i64: 1, 256>}, {transform_indices = @transform_4, window_bounds = array<i64: 16, 256>}]} {
    %c0 = arith.constant 0 : index
    %c0_0 = arith.constant 0 : index
    %0 = vector.load %arg1[%c0, %c0_0] : memref<16x16xf32, #tpu.memory_space<vmem>>, vector<16x16xf32>
    %c0_1 = arith.constant 0 : index
    %c0_2 = arith.constant 0 : index
    %1 = vector.load %arg3[%c0_1, %c0_2] : memref<16x256xf32, #tpu.memory_space<vmem>>, vector<16x128xf32>
    %cst = arith.constant dense<0.000000e+00> : vector<16x128xf32>
    %2 = tpu.matmul %0, %1, %cst {dimension_numbers = #tpu.dot_dimension_numbers<[1], [0], [0], [1], [0, 0, 1, 1], [], []>} : vector<16x16xf32>, vector<16x128xf32>, vector<16x128xf32> -> vector<16x128xf32>
    %c0_3 = arith.constant 0 : index
    %c0_4 = arith.constant 0 : index
    %3 = vector.load %arg4[%c0_3, %c0_4] : memref<1x256xf32, #tpu.memory_space<vmem>>, vector<1x128xf32>
    %4 = vector.broadcast %3 : vector<1x128xf32> to vector<16x128xf32>
    %5 = arith.addf %2, %4 : vector<16x128xf32>
    %c0_5 = arith.constant 0 : index
    %c0_6 = arith.constant 0 : index
    %6 = vector.load %arg5[%c0_5, %c0_6] : memref<16x256xf32, #tpu.memory_space<vmem>>, vector<16x128xf32>
    tpu.vector_store %arg5[%c0_5, %c0_6], %5 {strides = array<i32>} : memref<16x256xf32, #tpu.memory_space<vmem>>, vector<16x128xf32>,
    %c0_7 = arith.constant 0 : index
    %c0_8 = arith.constant 0 : index
    %7 = vector.load %arg2[%c0_7, %c0_8] : memref<16x16xf32, #tpu.memory_space<vmem>>, vector<16x16xf32>
    %c0_9 = arith.constant 0 : index
    %c128 = arith.constant 128 : index
    %8 = vector.load %arg3[%c0_9, %c128] : memref<16x256xf32, #tpu.memory_space<vmem>>, vector<16x128xf32>
    %cst_10 = arith.constant dense<0.000000e+00> : vector<16x128xf32>
    %9 = tpu.matmul %7, %8, %cst_10 {dimension_numbers = #tpu.dot_dimension_numbers<[1], [0], [0], [1], [0, 0, 1, 1], [], []>} : vector<16x16xf32>, vector<16x128xf32>, vector<16x128xf32> -> vector<16x128xf32>
    %c0_11 = arith.constant 0 : index
    %c128_12 = arith.constant 128 : index
    %10 = vector.load %arg4[%c0_11, %c128_12] : memref<1x256xf32, #tpu.memory_space<vmem>>, vector<1x128xf32>
    %11 = vector.broadcast %10 : vector<1x128xf32> to vector<16x128xf32>
    %12 = arith.addf %9, %11 : vector<16x128xf32>
    %c0_13 = arith.constant 0 : index
    %c128_14 = arith.constant 128 : index
    %13 = vector.load %arg5[%c0_13, %c128_14] : memref<16x256xf32, #tpu.memory_space<vmem>>, vector<16x128xf32>
    tpu.vector_store %arg5[%c0_13, %c128_14], %12 {strides = array<i32>} : memref<16x256xf32, #tpu.memory_space<vmem>>, vector<16x128xf32>,
    return
  }
  func.func @transform_0(%arg0: i32) -> (i32, i32) {
    %c0_i32 = arith.constant 0 : i32
    %c0_i32_0 = arith.constant 0 : i32
    return %arg0, %c0_i32 : i32, i32
  }
  func.func @transform_1(%arg0: i32) -> (i32, i32) {
    %c0_i32 = arith.constant 0 : i32
    %c0_i32_0 = arith.constant 0 : i32
    return %arg0, %c0_i32 : i32, i32
  }
  func.func @transform_2(%arg0: i32) -> (i32, i32) {
    %c0_i32 = arith.constant 0 : i32
    %c0_i32_0 = arith.constant 0 : i32
    %c0_i32_1 = arith.constant 0 : i32
    return %c0_i32, %c0_i32_0 : i32, i32
  }
  func.func @transform_3(%arg0: i32) -> (i32, i32) {
    %c0_i32 = arith.constant 0 : i32
    %c0_i32_0 = arith.constant 0 : i32
    %c0_i32_1 = arith.constant 0 : i32
    return %c0_i32, %c0_i32_0 : i32, i32
  }
  func.func @transform_4(%arg0: i32) -> (i32, i32) {
    %c0_i32 = arith.constant 0 : i32
    %c0_i32_0 = arith.constant 0 : i32
    return %arg0, %c0_i32 : i32, i32
  }
}

</mosaic_0001>

<llo_original>
// kernel: gc4_protein_forward.3
$region0: #{gc4_protein_forward.3}
  #allocation0 [shape = 'u32[]', space=smem, size = 0x4, offset = 0x4, fixed_abs, tag = 'smem constant byte address 0x4 - core index']
  #allocation1 [shape = 'u32[144,128]{1,0:T(1,128)}', space=vmem, size = 0x12000, scoped, tag = 'internal scratch']
  %s0 = inlined_call_operand.vmem [shape: f32[24,24], index: 0, kind: input, shape index: {}]
  %s1 = inlined_call_operand.vmem [shape: f32[24,24], index: 1, kind: input, shape index: {}]
  %s2 = inlined_call_operand.vmem [shape: f32[24,256], index: 2, kind: input, shape index: {}]
  %s3 = inlined_call_operand.vmem [shape: f32[1,256], index: 3, kind: input, shape index: {}]
  %s4 = inlined_call_operand.vmem [shape: f32[24,256], index: 4, kind: output, shape index: {}]
  %s5 = sld [smem:[#allocation0]]
  $region26: #{gc4_protein_forward.3} parent=0
    _
  %s7 = ssub.s32 1, %s5
  %s8 = scalar_select 0, %s7, %s5
  // Predicated region
  $region2: #{gc4_protein_forward.3} parent=0 // pred_check
    _
  $region3: #{gc4_protein_forward.3} parent=0 // pred_check_branch
    %10 = sbr.rel (0) target = $region5
  $region4: #{gc4_protein_forward.3} parent=0 // pred_region
    _
  $region5: #{gc4_protein_forward.3} parent=0 // pred_fallthru
    _
  // Predicated region
  $region6: #{gc4_protein_forward.3} parent=0 // pred_check
    _
  $region7: #{gc4_protein_forward.3} parent=0 // pred_check_branch
    %12 = sbr.rel (0) target = $region9
  $region8: #{gc4_protein_forward.3} parent=0 // pred_region
    _
  $region9: #{gc4_protein_forward.3} parent=0 // pred_fallthru
    _
  // Predicated region
  $region10: #{gc4_protein_forward.3} parent=0 // pred_check
    _
  $region11: #{gc4_protein_forward.3} parent=0 // pred_check_branch
    %14 = sbr.rel (0) target = $region13
  $region12: #{gc4_protein_forward.3} parent=0 // pred_region
    _
  $region13: #{gc4_protein_forward.3} parent=0 // pred_fallthru
    _
  // Predicated region
  $region14: #{gc4_protein_forward.3} parent=0 // pred_check
    _
  $region15: #{gc4_protein_forward.3} parent=0 // pred_check_branch
    %16 = sbr.rel (0) target = $region17
  $region16: #{gc4_protein_forward.3} parent=0 // pred_region
    _
  $region17: #{gc4_protein_forward.3} parent=0 // pred_fallthru
    _
  %v17 = vld [vmem:[%s0] sm:$0xff]
  %v18 = vld [vmem:[%s0 + $0x8] sm:$0xff]
  %v19 = vld [vmem:[%s0 + $0x10] sm:$0xff]
  %v20 = vld [vmem:[%s2] sm:$0xff]
  %v21 = vld [vmem:[%s2 + $0x10] sm:$0xff]
  %v22 = vld [vmem:[%s2 + $0x20] sm:$0xff]
  %v23 = vld [vmem:[%s3] sm:$0x1]
  %v25 = vlaneseq
  %v26 = vshrl.u32 %v25, 7
  %v27 = vsub.s32 0, %v26
  %v28 = vrot.slane %v23, %v27
  %vm30 = vcmask 195584
  %v32 = vsel %vm30, %v17, 0
  %v35 = vsel %vm30, %v18, 0
  %v38 = vsel %vm30, %v19, 0
  %40 = vmatprep.subr.mxu0 0.0
  %41 = vmatpush1.msra.mxu0 %v20
  %42 = vmatprep.subr.mxu0 0.0
  %43 = vmatpush1.msra.mxu0 %v21
  %44 = vmatprep.subr.mxu0 0.0
  %45 = vmatpush1.msra.mxu0 %v22
  %46 = vmatprep.subr.mxu0 0.0
  %47 = vmatpush1.msra.mxu0 0.0
  %48 = vmatprep.subr.mxu0 0.0
  %49 = vmatpush1.msra.mxu0 0.0
  %50 = vmatprep.subr.mxu0 0.0
  %51 = vmatpush1.msra.mxu0 0.0
  %52 = vmatprep.subr.mxu0 0.0
  %53 = vmatpush1.msra.mxu0 0.0
  %54 = vmatprep.subr.mxu0 0.0
  %55 = vmatpush1.msra.mxu0 0.0
  %56 = vmatprep.subr.mxu0 0.0
  %57 = vmatpush1.msra.mxu0 0.0
  %58 = vmatprep.subr.mxu0 0.0
  %59 = vmatpush1.msra.mxu0 0.0
  %60 = vmatprep.subr.mxu0 0.0
  %61 = vmatpush1.msra.mxu0 0.0
  %62 = vmatprep.subr.mxu0 0.0
  %63 = vmatpush1.msra.mxu0 0.0
  %64 = vmatprep.subr.mxu0 0.0
  %65 = vmatpush1.msra.mxu0 0.0
  %66 = vmatprep.subr.mxu0 0.0
  %67 = vmatpush1.msra.mxu0 0.0
  %68 = vmatprep.subr.mxu0 0.0
  %69 = vmatpush1.msra.mxu0 0.0
  %70 = vmatprep.subr.mxu0 0.0
  %71 = vmatpush1.msra.mxu0 0.0
  %72 = vmatprep.subr.mxu0 0.0
  %73 = vmatpush1.msra.mxu0 0.0
  %74 = vmatprep.subr.mxu0 0.0
  %75 = vmatpush1.msra.mxu0 0.0
  %76 = vmatprep.subr.mxu0 0.0
  %77 = vmatpush1.msra.mxu0 0.0
  %78 = vmatprep.subr.mxu0 0.0
  %79 = vmatpush1.msra.mxu0 0.0
  %80 = vmatprep.subr.mxu0 0.0
  %81 = vmatpush1.msra.mxu0 0.0
  %82 = vmatprep.subr.mxu0 0.0
  %83 = vmatpush1.msra.mxu0 0.0
  %84 = vmatprep.subr.mxu0 0.0
  %85 = vmatpush1.msra.mxu0 0.0
  %86 = vmatprep.subr.mxu0 0.0
  %87 = vmatpush1.msra.mxu0 0.0
  %88 = vmatprep.subr.mxu0 0.0
  %89 = vmatpush1.msra.mxu0 0.0
  %90 = vmatprep.subr.mxu0 0.0
  %91 = vmatpush1.msra.mxu0 0.0
  %92 = vmatprep.subr.mxu0 0.0
  %93 = vmatpush1.msra.mxu0 0.0
  %94 = vmatprep.subr.mxu0 0.0
  %95 = vmatpush1.msra.mxu0 0.0
  %96 = vmatprep.subr.mxu0 0.0
  %97 = vmatpush1.msra.mxu0 0.0
  %98 = vmatprep.subr.mxu0 0.0
  %99 = vmatpush1.msra.mxu0 0.0
  %100 = vmatprep.subr.mxu0 0.0
  %101 = vmatpush1.msra.mxu0 0.0
  %102 = vmatprep.subr.mxu0 0.0
  %103 = vmatpush1.msra.mxu0 0.0
  %104 = vmatprep.mubr.f32.mxu0 0.0
  %105 = vmatmul.mubr.f32.gmra.mrb[0].mxu0 %v32
  %v106 = vpop.f32.mrb[0].mxu0
  %v107 = vadd.f32 %v28, %v106
  %v108 = vpop.f32.mrb[0].mxu0
  %109 = vmatprep.mubr.f32.mxu0 0.0
  %110 = vmatmul.mubr.f32.gmra.mrb[0].mxu0 %v35
  %v111 = vpop.f32.mrb[0].mxu0
  %v112 = vadd.f32 %v28, %v111
  %v113 = vpop.f32.mrb[0].mxu0
  %114 = vmatprep.mubr.f32.mxu0 0.0
  %115 = vmatmul.mubr.f32.gmra.mrb[0].mxu0 %v38
  %v116 = vpop.f32.mrb[0].mxu0
  %v117 = vadd.f32 %v28, %v116
  %v118 = vpop.f32.mrb[0].mxu0
  %119 = vdwg.mxu0
  %120 = vst [vmem:[%s4] sm:$0xff] %v107
  %121 = vst [vmem:[%s4 + $0x10] sm:$0xff] %v112
  %122 = vst [vmem:[%s4 + $0x20] sm:$0xff] %v117
  %v123 = vld [vmem:[%s1] sm:$0xff]
  %v124 = vld [vmem:[%s1 + $0x8] sm:$0xff]
  %v125 = vld [vmem:[%s1 + $0x10] sm:$0xff]
  %v126 = vld [vmem:[%s2 + $0x8] sm:$0xff]
  %v127 = vld [vmem:[%s2 + $0x18] sm:$0xff]
  %v128 = vld [vmem:[%s2 + $0x28] sm:$0xff]
  %v129 = vld [vmem:[%s3 + $0x1] sm:$0x1]
  %v131 = vlaneseq
  %v132 = vshrl.u32 %v131, 7
  %v133 = vsub.s32 0, %v132
  %v134 = vrot.slane %v129, %v133
  %v137 = vsel %vm30, %v123, 0
  %v140 = vsel %vm30, %v124, 0
  %v143 = vsel %vm30, %v125, 0
  %145 = vmatprep.subr.mxu0 0.0
  %146 = vmatpush1.msra.mxu0 %v126
  %147 = vmatprep.subr.mxu0 0.0
  %148 = vmatpush1.msra.mxu0 %v127
  %149 = vmatprep.subr.mxu0 0.0
  %150 = vmatpush1.msra.mxu0 %v128
  %151 = vmatprep.subr.mxu0 0.0
  %152 = vmatpush1.msra.mxu0 0.0
  %153 = vmatprep.subr.mxu0 0.0
  %154 = vmatpush1.msra.mxu0 0.0
  %155 = vmatprep.subr.mxu0 0.0
  %156 = vmatpush1.msra.mxu0 0.0
  %157 = vmatprep.subr.mxu0 0.0
  %158 = vmatpush1.msra.mxu0 0.0
  %159 = vmatprep.subr.mxu0 0.0
  %160 = vmatpush1.msra.mxu0 0.0
  %161 = vmatprep.subr.mxu0 0.0
  %162 = vmatpush1.msra.mxu0 0.0
  %163 = vmatprep.subr.mxu0 0.0
  %164 = vmatpush1.msra.mxu0 0.0
  %165 = vmatprep.subr.mxu0 0.0
  %166 = vmatpush1.msra.mxu0 0.0
  %167 = vmatprep.subr.mxu0 0.0
  %168 = vmatpush1.msra.mxu0 0.0
  %169 = vmatprep.subr.mxu0 0.0
  %170 = vmatpush1.msra.mxu0 0.0
  %171 = vmatprep.subr.mxu0 0.0
  %172 = vmatpush1.msra.mxu0 0.0
  %173 = vmatprep.subr.mxu0 0.0
  %174 = vmatpush1.msra.mxu0 0.0
  %175 = vmatprep.subr.mxu0 0.0
  %176 = vmatpush1.msra.mxu0 0.0
  %177 = vmatprep.subr.mxu0 0.0
  %178 = vmatpush1.msra.mxu0 0.0
  %179 = vmatprep.subr.mxu0 0.0
  %180 = vmatpush1.msra.mxu0 0.0
  %181 = vmatprep.subr.mxu0 0.0
  %182 = vmatpush1.msra.mxu0 0.0
  %183 = vmatprep.subr.mxu0 0.0
  %184 = vmatpush1.msra.mxu0 0.0
  %185 = vmatprep.subr.mxu0 0.0
  %186 = vmatpush1.msra.mxu0 0.0
  %187 = vmatprep.subr.mxu0 0.0
  %188 = vmatpush1.msra.mxu0 0.0
  %189 = vmatprep.subr.mxu0 0.0
  %190 = vmatpush1.msra.mxu0 0.0
  %191 = vmatprep.subr.mxu0 0.0
  %192 = vmatpush1.msra.mxu0 0.0
  %193 = vmatprep.subr.mxu0 0.0
  %194 = vmatpush1.msra.mxu0 0.0
  %195 = vmatprep.subr.mxu0 0.0
  %196 = vmatpush1.msra.mxu0 0.0
  %197 = vmatprep.subr.mxu0 0.0
  %198 = vmatpush1.msra.mxu0 0.0
  %199 = vmatprep.subr.mxu0 0.0
  %200 = vmatpush1.msra.mxu0 0.0
  %201 = vmatprep.subr.mxu0 0.0
  %202 = vmatpush1.msra.mxu0 0.0
  %203 = vmatprep.subr.mxu0 0.0
  %204 = vmatpush1.msra.mxu0 0.0
  %205 = vmatprep.subr.mxu0 0.0
  %206 = vmatpush1.msra.mxu0 0.0
  %207 = vmatprep.subr.mxu0 0.0
  %208 = vmatpush1.msra.mxu0 0.0
  %209 = vmatprep.mubr.f32.mxu0 0.0
  %210 = vmatmul.mubr.f32.gmra.mrb[0].mxu0 %v137
  %v211 = vpop.f32.mrb[0].mxu0
  %v212 = vadd.f32 %v134, %v211
  %v213 = vpop.f32.mrb[0].mxu0
  %214 = vmatprep.mubr.f32.mxu0 0.0
  %215 = vmatmul.mubr.f32.gmra.mrb[0].mxu0 %v140
  %v216 = vpop.f32.mrb[0].mxu0
  %v217 = vadd.f32 %v134, %v216
  %v218 = vpop.f32.mrb[0].mxu0
  %219 = vmatprep.mubr.f32.mxu0 0.0
  %220 = vmatmul.mubr.f32.gmra.mrb[0].mxu0 %v143
  %v221 = vpop.f32.mrb[0].mxu0
  %v222 = vadd.f32 %v134, %v221
  %v223 = vpop.f32.mrb[0].mxu0
  %224 = vdwg.mxu0
  %225 = vst [vmem:[%s4 + $0x8] sm:$0xff] %v212
  %226 = vst [vmem:[%s4 + $0x18] sm:$0xff] %v217
  %227 = vst [vmem:[%s4 + $0x28] sm:$0xff] %v222
  // Predicated region
  $region18: #{gc4_protein_forward.3} parent=0 // pred_check
    _
  $region19: #{gc4_protein_forward.3} parent=0 // pred_check_branch
    %229 = sbr.rel (0) target = $region21
  $region20: #{gc4_protein_forward.3} parent=0 // pred_region
    _
  $region21: #{gc4_protein_forward.3} parent=0 // pred_fallthru
    _
  // Predicated region
  $region22: #{gc4_protein_forward.3} parent=0 // pred_check
    _
  $region23: #{gc4_protein_forward.3} parent=0 // pred_check_branch
    %231 = sbr.rel (0) target = $region25
  $region24: #{gc4_protein_forward.3} parent=0 // pred_region
    _
  $region25: #{gc4_protein_forward.3} parent=0 // pred_fallthru
    _

// kernel: gc4_protein_forward.2
$region0: #{gc4_protein_forward.2}
  #allocation0 [shape = 'u32[]', space=smem, size = 0x4, offset = 0x4, fixed_abs, tag = 'smem constant byte address 0x4 - core index']
  #allocation1 [shape = 'u32[144,128]{1,0:T(1,128)}', space=vmem, size = 0x12000, scoped, tag = 'internal scratch']
  %s0 = inlined_call_operand.vmem [shape: f32[16,16], index: 0, kind: input, shape index: {}]
  %s1 = inlined_call_operand.vmem [shape: f32[16,16], index: 1, kind: input, shape index: {}]
  %s2 = inlined_call_operand.vmem [shape: f32[16,256], index: 2, kind: input, shape index: {}]
  %s3 = inlined_call_operand.vmem [shape: f32[1,256], index: 3, kind: input, shape index: {}]
  %s4 = inlined_call_operand.vmem [shape: f32[16,256], index: 4, kind: output, shape index: {}]
  %s5 = sld [smem:[#allocation0]]
  $region26: #{gc4_protein_forward.2} parent=0
    _
  %s7 = ssub.s32 1, %s5
  %s8 = scalar_select 0, %s7, %s5
  // Predicated region
  $region2: #{gc4_protein_forward.2} parent=0 // pred_check
    _
  $region3: #{gc4_protein_forward.2} parent=0 // pred_check_branch
    %10 = sbr.rel (0) target = $region5
  $region4: #{gc4_protein_forward.2} parent=0 // pred_region
    _
  $region5: #{gc4_protein_forward.2} parent=0 // pred_fallthru
    _
  // Predicated region
  $region6: #{gc4_protein_forward.2} parent=0 // pred_check
    _
  $region7: #{gc4_protein_forward.2} parent=0 // pred_check_branch
    %12 = sbr.rel (0) target = $region9
  $region8: #{gc4_protein_forward.2} parent=0 // pred_region
    _
  $region9: #{gc4_protein_forward.2} parent=0 // pred_fallthru
    _
  // Predicated region
  $region10: #{gc4_protein_forward.2} parent=0 // pred_check
    _
  $region11: #{gc4_protein_forward.2} parent=0 // pred_check_branch
    %14 = sbr.rel (0) target = $region13
  $region12: #{gc4_protein_forward.2} parent=0 // pred_region
    _
  $region13: #{gc4_protein_forward.2} parent=0 // pred_fallthru
    _
  // Predicated region
  $region14: #{gc4_protein_forward.2} parent=0 // pred_check
    _
  $region15: #{gc4_protein_forward.2} parent=0 // pred_check_branch
    %16 = sbr.rel (0) target = $region17
  $region16: #{gc4_protein_forward.2} parent=0 // pred_region
    _
  $region17: #{gc4_protein_forward.2} parent=0 // pred_fallthru
    _
  %v17 = vld [vmem:[%s0] sm:$0xff]
  %v18 = vld [vmem:[%s0 + $0x8] sm:$0xff]
  %v19 = vld [vmem:[%s2] sm:$0xff]
  %v20 = vld [vmem:[%s2 + $0x10] sm:$0xff]
  %v21 = vld [vmem:[%s3] sm:$0x1]
  %v23 = vlaneseq
  %v24 = vshrl.u32 %v23, 7
  %v25 = vsub.s32 0, %v24
  %v26 = vrot.slane %v21, %v25
  %vm28 = vcmask 130048
  %v30 = vsel %vm28, %v17, 0
  %v33 = vsel %vm28, %v18, 0
  %35 = vmatprep.subr.mxu0 0.0
  %36 = vmatpush1.msra.mxu0 %v19
  %37 = vmatprep.subr.mxu0 0.0
  %38 = vmatpush1.msra.mxu0 %v20
  %39 = vmatprep.subr.mxu0 0.0
  %40 = vmatpush1.msra.mxu0 0.0
  %41 = vmatprep.subr.mxu0 0.0
  %42 = vmatpush1.msra.mxu0 0.0
  %43 = vmatprep.subr.mxu0 0.0
  %44 = vmatpush1.msra.mxu0 0.0
  %45 = vmatprep.subr.mxu0 0.0
  %46 = vmatpush1.msra.mxu0 0.0
  %47 = vmatprep.subr.mxu0 0.0
  %48 = vmatpush1.msra.mxu0 0.0
  %49 = vmatprep.subr.mxu0 0.0
  %50 = vmatpush1.msra.mxu0 0.0
  %51 = vmatprep.subr.mxu0 0.0
  %52 = vmatpush1.msra.mxu0 0.0
  %53 = vmatprep.subr.mxu0 0.0
  %54 = vmatpush1.msra.mxu0 0.0
  %55 = vmatprep.subr.mxu0 0.0
  %56 = vmatpush1.msra.mxu0 0.0
  %57 = vmatprep.subr.mxu0 0.0
  %58 = vmatpush1.msra.mxu0 0.0
  %59 = vmatprep.subr.mxu0 0.0
  %60 = vmatpush1.msra.mxu0 0.0
  %61 = vmatprep.subr.mxu0 0.0
  %62 = vmatpush1.msra.mxu0 0.0
  %63 = vmatprep.subr.mxu0 0.0
  %64 = vmatpush1.msra.mxu0 0.0
  %65 = vmatprep.subr.mxu0 0.0
  %66 = vmatpush1.msra.mxu0 0.0
  %67 = vmatprep.subr.mxu0 0.0
  %68 = vmatpush1.msra.mxu0 0.0
  %69 = vmatprep.subr.mxu0 0.0
  %70 = vmatpush1.msra.mxu0 0.0
  %71 = vmatprep.subr.mxu0 0.0
  %72 = vmatpush1.msra.mxu0 0.0
  %73 = vmatprep.subr.mxu0 0.0
  %74 = vmatpush1.msra.mxu0 0.0
  %75 = vmatprep.subr.mxu0 0.0
  %76 = vmatpush1.msra.mxu0 0.0
  %77 = vmatprep.subr.mxu0 0.0
  %78 = vmatpush1.msra.mxu0 0.0
  %79 = vmatprep.subr.mxu0 0.0
  %80 = vmatpush1.msra.mxu0 0.0
  %81 = vmatprep.subr.mxu0 0.0
  %82 = vmatpush1.msra.mxu0 0.0
  %83 = vmatprep.subr.mxu0 0.0
  %84 = vmatpush1.msra.mxu0 0.0
  %85 = vmatprep.subr.mxu0 0.0
  %86 = vmatpush1.msra.mxu0 0.0
  %87 = vmatprep.subr.mxu0 0.0
  %88 = vmatpush1.msra.mxu0 0.0
  %89 = vmatprep.subr.mxu0 0.0
  %90 = vmatpush1.msra.mxu0 0.0
  %91 = vmatprep.subr.mxu0 0.0
  %92 = vmatpush1.msra.mxu0 0.0
  %93 = vmatprep.subr.mxu0 0.0
  %94 = vmatpush1.msra.mxu0 0.0
  %95 = vmatprep.subr.mxu0 0.0
  %96 = vmatpush1.msra.mxu0 0.0
  %97 = vmatprep.subr.mxu0 0.0
  %98 = vmatpush1.msra.mxu0 0.0
  %99 = vmatprep.mubr.f32.mxu0 0.0
  %100 = vmatmul.mubr.f32.gmra.mrb[0].mxu0 %v30
  %v101 = vpop.f32.mrb[0].mxu0
  %v102 = vadd.f32 %v26, %v101
  %v103 = vpop.f32.mrb[0].mxu0
  %104 = vmatprep.mubr.f32.mxu0 0.0
  %105 = vmatmul.mubr.f32.gmra.mrb[0].mxu0 %v33
  %v106 = vpop.f32.mrb[0].mxu0
  %v107 = vadd.f32 %v26, %v106
  %v108 = vpop.f32.mrb[0].mxu0
  %109 = vdwg.mxu0
  %110 = vst [vmem:[%s4] sm:$0xff] %v102
  %111 = vst [vmem:[%s4 + $0x10] sm:$0xff] %v107
  %v112 = vld [vmem:[%s1] sm:$0xff]
  %v113 = vld [vmem:[%s1 + $0x8] sm:$0xff]
  %v114 = vld [vmem:[%s2 + $0x8] sm:$0xff]
  %v115 = vld [vmem:[%s2 + $0x18] sm:$0xff]
  %v116 = vld [vmem:[%s3 + $0x1] sm:$0x1]
  %v118 = vlaneseq
  %v119 = vshrl.u32 %v118, 7
  %v120 = vsub.s32 0, %v119
  %v121 = vrot.slane %v116, %v120
  %v124 = vsel %vm28, %v112, 0
  %v127 = vsel %vm28, %v113, 0
  %129 = vmatprep.subr.mxu0 0.0
  %130 = vmatpush1.msra.mxu0 %v114
  %131 = vmatprep.subr.mxu0 0.0
  %132 = vmatpush1.msra.mxu0 %v115
  %133 = vmatprep.subr.mxu0 0.0
  %134 = vmatpush1.msra.mxu0 0.0
  %135 = vmatprep.subr.mxu0 0.0
  %136 = vmatpush1.msra.mxu0 0.0
  %137 = vmatprep.subr.mxu0 0.0
  %138 = vmatpush1.msra.mxu0 0.0
  %139 = vmatprep.subr.mxu0 0.0
  %140 = vmatpush1.msra.mxu0 0.0
  %141 = vmatprep.subr.mxu0 0.0
  %142 = vmatpush1.msra.mxu0 0.0
  %143 = vmatprep.subr.mxu0 0.0
  %144 = vmatpush1.msra.mxu0 0.0
  %145 = vmatprep.subr.mxu0 0.0
  %146 = vmatpush1.msra.mxu0 0.0
  %147 = vmatprep.subr.mxu0 0.0
  %148 = vmatpush1.msra.mxu0 0.0
  %149 = vmatprep.subr.mxu0 0.0
  %150 = vmatpush1.msra.mxu0 0.0
  %151 = vmatprep.subr.mxu0 0.0
  %152 = vmatpush1.msra.mxu0 0.0
  %153 = vmatprep.subr.mxu0 0.0
  %154 = vmatpush1.msra.mxu0 0.0
  %155 = vmatprep.subr.mxu0 0.0
  %156 = vmatpush1.msra.mxu0 0.0
  %157 = vmatprep.subr.mxu0 0.0
  %158 = vmatpush1.msra.mxu0 0.0
  %159 = vmatprep.subr.mxu0 0.0
  %160 = vmatpush1.msra.mxu0 0.0
  %161 = vmatprep.subr.mxu0 0.0
  %162 = vmatpush1.msra.mxu0 0.0
  %163 = vmatprep.subr.mxu0 0.0
  %164 = vmatpush1.msra.mxu0 0.0
  %165 = vmatprep.subr.mxu0 0.0
  %166 = vmatpush1.msra.mxu0 0.0
  %167 = vmatprep.subr.mxu0 0.0
  %168 = vmatpush1.msra.mxu0 0.0
  %169 = vmatprep.subr.mxu0 0.0
  %170 = vmatpush1.msra.mxu0 0.0
  %171 = vmatprep.subr.mxu0 0.0
  %172 = vmatpush1.msra.mxu0 0.0
  %173 = vmatprep.subr.mxu0 0.0
  %174 = vmatpush1.msra.mxu0 0.0
  %175 = vmatprep.subr.mxu0 0.0
  %176 = vmatpush1.msra.mxu0 0.0
  %177 = vmatprep.subr.mxu0 0.0
  %178 = vmatpush1.msra.mxu0 0.0
  %179 = vmatprep.subr.mxu0 0.0
  %180 = vmatpush1.msra.mxu0 0.0
  %181 = vmatprep.subr.mxu0 0.0
  %182 = vmatpush1.msra.mxu0 0.0
  %183 = vmatprep.subr.mxu0 0.0
  %184 = vmatpush1.msra.mxu0 0.0
  %185 = vmatprep.subr.mxu0 0.0
  %186 = vmatpush1.msra.mxu0 0.0
  %187 = vmatprep.subr.mxu0 0.0
  %188 = vmatpush1.msra.mxu0 0.0
  %189 = vmatprep.subr.mxu0 0.0
  %190 = vmatpush1.msra.mxu0 0.0
  %191 = vmatprep.subr.mxu0 0.0
  %192 = vmatpush1.msra.mxu0 0.0
  %193 = vmatprep.mubr.f32.mxu0 0.0
  %194 = vmatmul.mubr.f32.gmra.mrb[0].mxu0 %v124
  %v195 = vpop.f32.mrb[0].mxu0
  %v196 = vadd.f32 %v121, %v195
  %v197 = vpop.f32.mrb[0].mxu0
  %198 = vmatprep.mubr.f32.mxu0 0.0
  %199 = vmatmul.mubr.f32.gmra.mrb[0].mxu0 %v127
  %v200 = vpop.f32.mrb[0].mxu0
  %v201 = vadd.f32 %v121, %v200
  %v202 = vpop.f32.mrb[0].mxu0
  %203 = vdwg.mxu0
  %204 = vst [vmem:[%s4 + $0x8] sm:$0xff] %v196
  %205 = vst [vmem:[%s4 + $0x18] sm:$0xff] %v201
  // Predicated region
  $region18: #{gc4_protein_forward.2} parent=0 // pred_check
    _
  $region19: #{gc4_protein_forward.2} parent=0 // pred_check_branch
    %207 = sbr.rel (0) target = $region21
  $region20: #{gc4_protein_forward.2} parent=0 // pred_region
    _
  $region21: #{gc4_protein_forward.2} parent=0 // pred_fallthru
    _
  // Predicated region
  $region22: #{gc4_protein_forward.2} parent=0 // pred_check
    _
  $region23: #{gc4_protein_forward.2} parent=0 // pred_check_branch
    %209 = sbr.rel (0) target = $region25
  $region24: #{gc4_protein_forward.2} parent=0 // pred_region
    _
  $region25: #{gc4_protein_forward.2} parent=0 // pred_fallthru
    _

</llo_original>
